<compile_context>
chip_gen: v6e
topology: v6e:2x2x1
jax: 0.10.0
libtpu: 0.0.40
codegen_flags: <defaults>
</compile_context>

<pallas_src>
import jax
import jax.numpy as jnp
from jax.experimental import pallas as pl
from jax.experimental.pallas import tpu as pltpu


def nli_head_kernel(x_ref, w_ref, p_ref, o_ref):
    # x: (tm, H) bf16    w: (3, H) bf16
    # p: (3, 3) f32, columns = [bias, gamma, beta]
    # o: (3, tm)  -- classes on sublanes, rows (M) on the lane axis.
    x = x_ref[...]
    w = w_ref[...]
    p = p_ref[...]

    # dense (transposed): h = w @ x^T + b  -> (3, tm), f32 MXU accumulation
    h = jax.lax.dot_general(
        w, x,
        dimension_numbers=(((1,), (1,)), ((), ())),
        preferred_element_type=jnp.float32,
    )
    h = h + p[:, 0:1]                                   # bias (3,1) lane-bcast

    # gelu_fast (tanh approximation, constants from the torch module)
    h = 0.5 * h * (1.0 + jnp.tanh(h * 0.7978845608 * (1.0 + 0.044715 * h * h)))

    # LayerNorm over the 3-class axis (sublanes), biased variance, eps=1e-12.
    # Unrolled 3-element reduction: stays on the VPU, no generic reduce.
    h0 = h[0:1, :]
    h1 = h[1:2, :]
    h2 = h[2:3, :]
    mean = (h0 + h1 + h2) * (1.0 / 3.0)                 # (1, tm)
    d0 = h0 - mean
    d1 = h1 - mean
    d2 = h2 - mean
    var = (d0 * d0 + d1 * d1 + d2 * d2) * (1.0 / 3.0)   # (1, tm)
    inv = jax.lax.rsqrt(var + 1e-12)                    # (1, tm)
    out = (h - mean) * inv                              # (3, tm)
    out = out * p[:, 1:2] + p[:, 2:3]                   # gamma, beta

    o_ref[...] = out.astype(o_ref.dtype)


def nli_predictions(x, w, b, gamma, beta, *, tm=None,
                    compute_dtype=jnp.bfloat16):
    """x: [B, S, H], w: [H, 3], b/gamma/beta: [3]  ->  [B, S, 3]."""
    B, S, H = x.shape
    M = B * S

    x2 = x.reshape(M, H).astype(compute_dtype)          # streamed operand
    w_t = jnp.transpose(w).astype(compute_dtype)        # (3, H), lane dim = H

    # bias / gamma / beta packed into one resident (3, 3) f32 block (columns).
    params = jnp.stack(
        [b.reshape(3), gamma.reshape(3), beta.reshape(3)], axis=1
    ).astype(jnp.float32)

    # Tile size: ~4 MiB of x per buffer (Pallas double-buffers it); rows are a
    # multiple of 128 so the (3, tm) output stores stay lane-dense/unmasked.
    if tm is None:
        bytes_per_row = H * jnp.dtype(compute_dtype).itemsize
        tm = (4 << 20) // max(1, bytes_per_row)
        tm = max(128, (tm // 128) * 128)
    if M <= tm:
        tm = M                       # single full-extent tile (block == dim)
    num_tiles = pl.cdiv(M, tm)       # ragged last tile handled by Pallas

    out = pl.pallas_call(
        nli_head_kernel,
        out_shape=jax.ShapeDtypeStruct((3, M), x.dtype),
        grid=(num_tiles,),
        in_specs=[
            pl.BlockSpec((tm, H), lambda i: (i, 0)),    # streamed x tile
            pl.BlockSpec((3, H), lambda i: (0, 0)),     # resident weight
            pl.BlockSpec((3, 3), lambda i: (0, 0)),     # resident b/gamma/beta
        ],
        out_specs=pl.BlockSpec((3, tm), lambda i: (0, i)),
        compiler_params=pltpu.CompilerParams(
            dimension_semantics=("parallel",),
            vmem_limit_bytes=48 * 1024 * 1024,
        ),
    )(x2, w_t, params)

    return jnp.transpose(out).reshape(B, S, 3)


def _reference(x, w, b, gamma, beta):
    h = jnp.einsum("bsh,ho->bso", x, w) + b.reshape(1, 1, 3)
    h = 0.5 * h * (1.0 + jnp.tanh(h * 0.7978845608 * (1.0 + 0.044715 * h * h)))
    mean = jnp.mean(h, axis=-1, keepdims=True)
    var = jnp.mean((h - mean) ** 2, axis=-1, keepdims=True)
    h = (h - mean) * jax.lax.rsqrt(var + 1e-12)
    return h * gamma.reshape(1, 1, 3) + beta.reshape(1, 1, 3)


if __name__ == "__main__":
    key = jax.random.PRNGKey(0)
    kx, kw, kb, kg, kbeta, kx2 = jax.random.split(key, 6)

    # --- small shape consistent with the module (batch=2, seq=8, hidden=32)
    B, S, H = 2, 8, 32
    x = jax.random.normal(kx, (B, S, H), dtype=jnp.float32)
    w = jax.random.normal(kw, (H, 3), dtype=jnp.float32) * 0.02
    b = jax.random.normal(kb, (3,), dtype=jnp.float32) * 0.02
    gamma = 1.0 + 0.1 * jax.random.normal(kg, (3,), dtype=jnp.float32)
    beta = 0.1 * jax.random.normal(kbeta, (3,), dtype=jnp.float32)

    out = jax.block_until_ready(nli_predictions(x, w, b, gamma, beta))
    # Reference on bf16-rounded inputs (kernel feeds bf16 to the MXU, f32 acc).
    ref = _reference(x.astype(jnp.bfloat16).astype(jnp.float32),
                     w.astype(jnp.bfloat16).astype(jnp.float32),
                     b, gamma, beta)
    assert out.shape == (B, S, 3)
    assert jnp.allclose(out, ref, atol=2e-3, rtol=2e-3), "mismatch (small)"

    # --- multi-tile + ragged-last-tile path (M = 4*333 = 1332, not /128)
    B2, S2, H2 = 4, 333, 256
    x2b = jax.random.normal(kx2, (B2, S2, H2), dtype=jnp.float32)
    w2 = jax.random.normal(kw, (H2, 3), dtype=jnp.float32) * 0.02
    out2 = jax.block_until_ready(
        nli_predictions(x2b, w2, b, gamma, beta, tm=256))
    ref2 = _reference(x2b.astype(jnp.bfloat16).astype(jnp.float32),
                      w2.astype(jnp.bfloat16).astype(jnp.float32),
                      b, gamma, beta)
    assert out2.shape == (B2, S2, 3)
    assert jnp.allclose(out2, ref2, atol=2e-3, rtol=2e-3), "mismatch (ragged)"

    print("KERNEL_OK")
</pallas_src>

<mosaic_0001>
module attributes {stable_mosaic.version = 11 : i64} {
  func.func @nli_head_kernel(%arg0: i32, %arg1: memref<16x32xbf16, #tpu.memory_space<vmem>>, %arg2: memref<3x32xbf16, #tpu.memory_space<vmem>>, %arg3: memref<3x3xf32, #tpu.memory_space<vmem>>, %arg4: memref<3x16xf32, #tpu.memory_space<vmem>>) attributes {dimension_semantics = [#tpu.dimension_semantics<parallel>], iteration_bounds = array<i64: 1>, scalar_prefetch = 0 : i64, scratch_operands = 0 : i64, tpu.core_type = #tpu.core_type<tc>, window_params = [{transform_indices = @transform_0, window_bounds = array<i64: 16, 32>}, {pipeline_mode = #tpu.pipeline_mode<synchronous>, transform_indices = @transform_1, window_bounds = array<i64: 3, 32>}, {pipeline_mode = #tpu.pipeline_mode<synchronous>, transform_indices = @transform_2, window_bounds = array<i64: 3, 3>}, {transform_indices = @transform_3, window_bounds = array<i64: 3, 16>}]} {
    %c0 = arith.constant 0 : index
    %c0_0 = arith.constant 0 : index
    %0 = vector.load %arg1[%c0, %c0_0] : memref<16x32xbf16, #tpu.memory_space<vmem>>, vector<16x32xbf16>
    %c0_1 = arith.constant 0 : index
    %c0_2 = arith.constant 0 : index
    %1 = vector.load %arg2[%c0_1, %c0_2] : memref<3x32xbf16, #tpu.memory_space<vmem>>, vector<3x32xbf16>
    %c0_3 = arith.constant 0 : index
    %c0_4 = arith.constant 0 : index
    %2 = vector.load %arg3[%c0_3, %c0_4] : memref<3x3xf32, #tpu.memory_space<vmem>>, vector<3x3xf32>
    %cst = arith.constant dense<0.000000e+00> : vector<3x16xf32>
    %3 = tpu.matmul %1, %0, %cst {dimension_numbers = #tpu.dot_dimension_numbers<[1], [1], [0], [0], [0, 0, 1, 0], [], []>} : vector<3x32xbf16>, vector<16x32xbf16>, vector<3x16xf32> -> vector<3x16xf32>
    %4 = vector.extract_strided_slice %2 {offsets = [0, 0], sizes = [3, 1], strides = [1, 1]} : vector<3x3xf32> to vector<3x1xf32>
    %5 = vector.broadcast %4 : vector<3x1xf32> to vector<3x16xf32>
    %6 = arith.addf %3, %5 : vector<3x16xf32>
    %cst_5 = arith.constant 5.000000e-01 : f32
    %7 = vector.broadcast %cst_5 : f32 to vector<3x16xf32>
    %8 = arith.mulf %7, %6 : vector<3x16xf32>
    %cst_6 = arith.constant 0.797884583 : f32
    %9 = vector.broadcast %cst_6 : f32 to vector<3x16xf32>
    %10 = arith.mulf %6, %9 : vector<3x16xf32>
    %cst_7 = arith.constant 4.471500e-02 : f32
    %11 = vector.broadcast %cst_7 : f32 to vector<3x16xf32>
    %12 = arith.mulf %11, %6 : vector<3x16xf32>
    %13 = arith.mulf %12, %6 : vector<3x16xf32>
    %cst_8 = arith.constant 1.000000e+00 : f32
    %14 = vector.broadcast %cst_8 : f32 to vector<3x16xf32>
    %15 = arith.addf %14, %13 : vector<3x16xf32>
    %16 = arith.mulf %10, %15 : vector<3x16xf32>
    %17 = math.tanh %16 : vector<3x16xf32>
    %cst_9 = arith.constant 1.000000e+00 : f32
    %18 = vector.broadcast %cst_9 : f32 to vector<3x16xf32>
    %19 = arith.addf %18, %17 : vector<3x16xf32>
    %20 = arith.mulf %8, %19 : vector<3x16xf32>
    %21 = vector.extract_strided_slice %20 {offsets = [0, 0], sizes = [1, 16], strides = [1, 1]} : vector<3x16xf32> to vector<1x16xf32>
    %22 = vector.extract_strided_slice %20 {offsets = [1, 0], sizes = [1, 16], strides = [1, 1]} : vector<3x16xf32> to vector<1x16xf32>
    %23 = vector.extract_strided_slice %20 {offsets = [2, 0], sizes = [1, 16], strides = [1, 1]} : vector<3x16xf32> to vector<1x16xf32>
    %24 = arith.addf %21, %22 : vector<1x16xf32>
    %25 = arith.addf %24, %23 : vector<1x16xf32>
    %cst_10 = arith.constant 0.333333343 : f32
    %26 = vector.broadcast %cst_10 : f32 to vector<1x16xf32>
    %27 = arith.mulf %25, %26 : vector<1x16xf32>
    %28 = arith.subf %21, %27 : vector<1x16xf32>
    %29 = arith.subf %22, %27 : vector<1x16xf32>
    %30 = arith.subf %23, %27 : vector<1x16xf32>
    %31 = arith.mulf %28, %28 : vector<1x16xf32>
    %32 = arith.mulf %29, %29 : vector<1x16xf32>
    %33 = arith.addf %31, %32 : vector<1x16xf32>
    %34 = arith.mulf %30, %30 : vector<1x16xf32>
    %35 = arith.addf %33, %34 : vector<1x16xf32>
    %cst_11 = arith.constant 0.333333343 : f32
    %36 = vector.broadcast %cst_11 : f32 to vector<1x16xf32>
    %37 = arith.mulf %35, %36 : vector<1x16xf32>
    %cst_12 = arith.constant 9.99999996E-13 : f32
    %38 = vector.broadcast %cst_12 : f32 to vector<1x16xf32>
    %39 = arith.addf %37, %38 : vector<1x16xf32>
    %40 = math.rsqrt %39 : vector<1x16xf32>
    %41 = vector.broadcast %27 : vector<1x16xf32> to vector<3x16xf32>
    %42 = arith.subf %20, %41 : vector<3x16xf32>
    %43 = vector.broadcast %40 : vector<1x16xf32> to vector<3x16xf32>
    %44 = arith.mulf %42, %43 : vector<3x16xf32>
    %45 = vector.extract_strided_slice %2 {offsets = [0, 1], sizes = [3, 1], strides = [1, 1]} : vector<3x3xf32> to vector<3x1xf32>
    %46 = vector.broadcast %45 : vector<3x1xf32> to vector<3x16xf32>
    %47 = arith.mulf %44, %46 : vector<3x16xf32>
    %48 = vector.extract_strided_slice %2 {offsets = [0, 2], sizes = [3, 1], strides = [1, 1]} : vector<3x3xf32> to vector<3x1xf32>
    %49 = vector.broadcast %48 : vector<3x1xf32> to vector<3x16xf32>
    %50 = arith.addf %47, %49 : vector<3x16xf32>
    %c0_13 = arith.constant 0 : index
    %c0_14 = arith.constant 0 : index
    %51 = vector.load %arg4[%c0_13, %c0_14] : memref<3x16xf32, #tpu.memory_space<vmem>>, vector<3x16xf32>
    tpu.vector_store %arg4[%c0_13, %c0_14], %50 {strides = array<i32>} : memref<3x16xf32, #tpu.memory_space<vmem>>, vector<3x16xf32>,
    return
  }
  func.func @transform_0(%arg0: i32) -> (i32, i32) {
    %c0_i32 = arith.constant 0 : i32
    %c0_i32_0 = arith.constant 0 : i32
    return %arg0, %c0_i32 : i32, i32
  }
  func.func @transform_1(%arg0: i32) -> (i32, i32) {
    %c0_i32 = arith.constant 0 : i32
    %c0_i32_0 = arith.constant 0 : i32
    %c0_i32_1 = arith.constant 0 : i32
    return %c0_i32, %c0_i32_0 : i32, i32
  }
  func.func @transform_2(%arg0: i32) -> (i32, i32) {
    %c0_i32 = arith.constant 0 : i32
    %c0_i32_0 = arith.constant 0 : i32
    %c0_i32_1 = arith.constant 0 : i32
    return %c0_i32, %c0_i32_0 : i32, i32
  }
  func.func @transform_3(%arg0: i32) -> (i32, i32) {
    %c0_i32 = arith.constant 0 : i32
    %c0_i32_0 = arith.constant 0 : i32
    return %c0_i32, %arg0 : i32, i32
  }
}

</mosaic_0001>

<llo_original>
// kernel: tpu_custom_call.1
$region0: #{tpu_custom_call.1}
  #allocation0 [shape = 'u32[]', space=smem, size = 0x4, offset = 0x4, fixed_abs, tag = 'smem constant byte address 0x4 - core index']
  #allocation1 [shape = 'u32[144,128]{1,0:T(1,128)}', space=vmem, size = 0x12000, scoped, tag = 'internal scratch']
  %s0 = inlined_call_operand.hbm [shape: bf16[16,32], index: 0, kind: input, shape index: {}]
  %s1 = inlined_call_operand.hbm [shape: bf16[3,32], index: 1, kind: input, shape index: {}]
  %s2 = inlined_call_operand.hbm [shape: f32[3,3], index: 2, kind: input, shape index: {}]
  %s3 = inlined_call_operand.hbm [shape: f32[3,16], index: 3, kind: output, shape index: {}]
  %s4 = sld [smem:[#allocation0]]
  $region34: #{tpu_custom_call.1} parent=0
    _
  %s6 = ssub.s32 1, %s4
  %s7 = scalar_select 0, %s6, %s4
  $region1: #{tpu_custom_call.1} parent=0
    #allocation2 [shape = 'u8[4096]{0}', space=vmem, size = 0x1000, scoped, tag = 'input window, operand 0, single buffered']
    #allocation3 [shape = 's32[1]{0}', space=sflag, size = 0x4, scoped, tag = 'scoped memory for tpu_custom_call.1']
    #allocation4 [shape = 's32[1]{0}', space=sflag, size = 0x4, scoped, tag = 'scoped memory for tpu_custom_call.1']
    #allocation5 [shape = 'u8[1024]{0}', space=vmem, size = 0x400, scoped, tag = 'input window, operand 1, single buffered']
    #allocation6 [shape = 's32[1]{0}', space=sflag, size = 0x4, scoped, tag = 'scoped memory for tpu_custom_call.1']
    #allocation7 [shape = 'u8[2048]{0}', space=vmem, size = 0x800, scoped, tag = 'input window, operand 2, single buffered']
    #allocation8 [shape = 'u8[2048]{0}', space=vmem, size = 0x800, scoped, tag = 'output window, operand 0, single buffered']
    %8 = vsyncpa [#allocation3], 0
    %9 = vsyncpa [#allocation6], 0
    %10 = vsyncpa [#allocation4], 0
    // Predicated region
    $region2: #{tpu_custom_call.1} parent=1 // pred_check
      _
    $region3: #{tpu_custom_call.1} parent=1 // pred_check_branch
      %12 = sbr.rel (0) target = $region5
    $region4: #{tpu_custom_call.1} parent=1 // pred_region
      %s14 = ssub.s32 128, 128
      %15 = vsyncadd [#allocation3], %s14
      %s16 = sshll.u32 [#allocation2], 4
      %s17 = int_to_ptr.vmem [resolvable:$true] %s16
      %22 = dma.hbm_to_vmem [thread:$0]  %s0, 128, %s17, [#allocation3], 64, 64, 4
    $region5: #{tpu_custom_call.1} parent=1 // pred_fallthru
      _
    // Predicated region
    $region6: #{tpu_custom_call.1} parent=1 // pred_check
      _
    $region7: #{tpu_custom_call.1} parent=1 // pred_check_branch
      %24 = sbr.rel (0) target = $region9
    $region8: #{tpu_custom_call.1} parent=1 // pred_region
      %s26 = ssub.s32 32, 32
      %27 = vsyncadd [#allocation6], %s26
      %s29 = sshll.u32 [#allocation5], 4
      %s30 = int_to_ptr.vmem [resolvable:$true] %s29
      %32 = dma.hbm_to_vmem [thread:$0]  %s1, 32, %s30, [#allocation6]
    $region9: #{tpu_custom_call.1} parent=1 // pred_fallthru
      _
    // Predicated region
    $region10: #{tpu_custom_call.1} parent=1 // pred_check
      _
    $region11: #{tpu_custom_call.1} parent=1 // pred_check_branch
      %34 = sbr.rel (0) target = $region13
    $region12: #{tpu_custom_call.1} parent=1 // pred_region
      %s36 = ssub.s32 64, 64
      %37 = vsyncadd [#allocation6], %s36
      %s39 = sshll.u32 [#allocation7], 4
      %s40 = int_to_ptr.vmem [resolvable:$true] %s39
      %42 = dma.hbm_to_vmem [thread:$0]  %s2, 64, %s40, [#allocation6]
    $region13: #{tpu_custom_call.1} parent=1 // pred_fallthru
      _
    // Predicated region
    $region14: #{tpu_custom_call.1} parent=1 // pred_check
      _
    $region15: #{tpu_custom_call.1} parent=1 // pred_check_branch
      %44 = sbr.rel (0) target = $region17
    $region16: #{tpu_custom_call.1} parent=1 // pred_region
      %45 = dma.done [#allocation3], 128
    $region17: #{tpu_custom_call.1} parent=1 // pred_fallthru
      _
    // Predicated region
    $region18: #{tpu_custom_call.1} parent=1 // pred_check
      _
    $region19: #{tpu_custom_call.1} parent=1 // pred_check_branch
      %47 = sbr.rel (0) target = $region21
    $region20: #{tpu_custom_call.1} parent=1 // pred_region
      %48 = dma.done [#allocation6], 32
    $region21: #{tpu_custom_call.1} parent=1 // pred_fallthru
      _
    // Predicated region
    $region22: #{tpu_custom_call.1} parent=1 // pred_check
      _
    $region23: #{tpu_custom_call.1} parent=1 // pred_check_branch
      %50 = sbr.rel (0) target = $region25
    $region24: #{tpu_custom_call.1} parent=1 // pred_region
      %51 = dma.done [#allocation6], 64
    $region25: #{tpu_custom_call.1} parent=1 // pred_fallthru
      _
    %v53 = vld [vmem:[#allocation2] sm:$0xf]
    %v54 = vld [vmem:[#allocation2 + $0x4] sm:$0xf]
    %v55 = vld [vmem:[#allocation5] sm:$0x3]
    %v56 = vld [vmem:[#allocation7] sm:$0x7]
    %58 = vset.pattern.permute.xlu0 0
    %59 = vperm.xlu0 %58, %v56
    %v60 = vpop.permute.xlu0 %59
    %v64 = vunpack.c.l.b16 %v53
    %v65 = vunpack.c.l.b16 %v54
    %v66 = vpack.c.b16 %v65, %v64
    %vm67 = vcmask 261120
    %v69 = vsel %vm67, %v55, 0
    %v72 = vsel %vm67, %v66, 0
    %74 = vmatprep.subr.bf16.mxu0 0
    %75 = vmatpush1.bf16.xpose.msra.mxu0 0
    %76 = vmatprep.subr.bf16.mxu0 0
    %77 = vmatpush1.bf16.xpose.msra.mxu0 0
    %78 = vmatprep.subr.bf16.mxu0 0
    %79 = vmatpush1.bf16.xpose.msra.mxu0 0
    %80 = vmatprep.subr.bf16.mxu0 0
    %81 = vmatpush1.bf16.xpose.msra.mxu0 0
    %82 = vmatprep.subr.bf16.mxu0 0
    %83 = vmatpush1.bf16.xpose.msra.mxu0 0
    %84 = vmatprep.subr.bf16.mxu0 0
    %85 = vmatpush1.bf16.xpose.msra.mxu0 0
    %86 = vmatprep.subr.bf16.mxu0 0
    %87 = vmatpush1.bf16.xpose.msra.mxu0 0
    %88 = vmatprep.subr.bf16.mxu0 0
    %89 = vmatpush1.bf16.xpose.msra.mxu0 %v72
    %90 = vmatprep.subr.bf16.mxu0 0
    %91 = vmatpush2.bf16.xpose.msra.mxu0 0
    %92 = vmatprep.subr.bf16.mxu0 0
    %93 = vmatpush2.bf16.xpose.msra.mxu0 0
    %94 = vmatprep.subr.bf16.mxu0 0
    %95 = vmatpush2.bf16.xpose.msra.mxu0 0
    %96 = vmatprep.subr.bf16.mxu0 0
    %97 = vmatpush2.bf16.xpose.msra.mxu0 0
    %98 = vmatprep.subr.bf16.mxu0 0
    %99 = vmatpush2.bf16.xpose.msra.mxu0 0
    %100 = vmatprep.subr.bf16.mxu0 0
    %101 = vmatpush2.bf16.xpose.msra.mxu0 0
    %102 = vmatprep.subr.bf16.mxu0 0
    %103 = vmatpush2.bf16.xpose.msra.mxu0 0
    %104 = vmatprep.subr.bf16.mxu0 0
    %105 = vmatpush2.bf16.xpose.msra.mxu0 0
    %106 = vmatprep.mubr.bf16.mxu0 0
    %107 = vmatmul.mubr.bf16.gmra.mxu0 %v69
    %v108 = vpop.f32.mrf.mxu0
    %v109 = vadd.f32 %v60, %v108
    %v110 = vpop.f32.mrf.mxu0
    %v111 = vpop.f32.mrf.mxu0
    %v112 = vpop.f32.mrf.mxu0
    %113 = vdwg.mxu0
    %v114 = vmul.f32 %v109, 0.5
    %v115 = vmul.f32 %v109, 0.7978846
    %v116 = vmul.f32 %v109, 0.044715
    %v117 = vmul.f32 %v116, %v109
    %v118 = vadd.f32 %v117, 1.0
    %v119 = vmul.f32 %v115, %v118
    %v120 = vtanh.pop %v119
    %v121 = vadd.f32 %v120, 1.0
    %v122 = vmul.f32 %v114, %v121
    %v124 = vrot.slane %v122, 1
    %v126 = vadd.f32 %v122, %v124
    %v127 = vrot.slane %v122, 2
    %v129 = vadd.f32 %v126, %v127
    %v130 = vmul.f32 %v129, 0.33333334
    %v131 = vsub.f32 %v122, %v130
    %v133 = vrot.slane %v130, 7
    %v135 = vsub.f32 %v122, %v133
    %v136 = vrot.slane %v130, 6
    %v138 = vsub.f32 %v122, %v136
    %v139 = vmul.f32 %v131, %v131
    %v140 = vmul.f32 %v135, %v135
    %v142 = vrot.slane %v140, 1
    %v144 = vadd.f32 %v139, %v142
    %v145 = vmul.f32 %v138, %v138
    %v147 = vrot.slane %v145, 2
    %v149 = vadd.f32 %v144, %v147
    %v150 = vmul.f32 %v149, 0.33333334
    %v151 = vadd.f32 %v150, 1e-12
    %v152 = vrsqrt.pop %v151
    %v153 = vlaneseq
    %v154 = vshrl.u32 %v153, 7
    %v155 = vsub.s32 0, %v154
    %v156 = vrot.slane %v130, %v155
    %v157 = vsub.f32 %v122, %v156
    %v158 = vlaneseq
    %v159 = vshrl.u32 %v158, 7
    %v160 = vsub.s32 0, %v159
    %v161 = vrot.slane %v152, %v160
    %v162 = vmul.f32 %v157, %v161
    %163 = vset.pattern.permute.xlu0 1
    %164 = vperm.xlu0 %163, %v56
    %v165 = vpop.permute.xlu0 %164
    %v167 = vmul.f32 %v162, %v165
    %168 = vset.pattern.permute.xlu0 2
    %169 = vperm.xlu0 %168, %v56
    %v170 = vpop.permute.xlu0 %169
    %v172 = vadd.f32 %v167, %v170
    %vm173 = vcmask 124928
    %174 = vst.msk [vmem:[#allocation8] sm:$0x7] %vm173, %v172
    // Predicated region
    $region26: #{tpu_custom_call.1} parent=1 // pred_check
      _
    $region27: #{tpu_custom_call.1} parent=1 // pred_check_branch
      %176 = sbr.rel (0) target = $region29
    $region28: #{tpu_custom_call.1} parent=1 // pred_region
      %s178 = ssub.s32 64, 64
      %179 = vsyncadd [#allocation4], %s178
      %s181 = sshll.u32 [#allocation8], 4
      %s182 = int_to_ptr.vmem [resolvable:$true] %s181
      %184 = dma.vmem_to_hbm [thread:$0]  %s182, 64, %s3, [#allocation4]
    $region29: #{tpu_custom_call.1} parent=1 // pred_fallthru
      _
    // Predicated region
    $region30: #{tpu_custom_call.1} parent=1 // pred_check
      _
    $region31: #{tpu_custom_call.1} parent=1 // pred_check_branch
      %186 = sbr.rel (0) target = $region33
    $region32: #{tpu_custom_call.1} parent=1 // pred_region
      %187 = dma.done [#allocation4], 64
    $region33: #{tpu_custom_call.1} parent=1 // pred_fallthru
      _
    %188 = vsyncpa [#allocation3], 1
    %189 = vsyncpa [#allocation6], 1
    %190 = vsyncpa [#allocation4], 1

</llo_original>
